<compile_context>
chip_gen: v7x
topology: tpu7x:2x2x1
jax: 0.10.0
libtpu: 0.0.40
codegen_flags: <defaults>
</compile_context>

<pallas_src>
import jax
import jax.numpy as jnp
import numpy as np
from jax.experimental import pallas as pl
from jax.experimental.pallas import tpu as pltpu

_SUB = 128  # sub-tile edge (vreg lane width; also the phase-1 row tile)


def _round_up(a, b):
    return (a + b - 1) // b * b


# --------------- phase 1: node predictor + edge pre-projections ---------------
def precompute_kernel(x_ref, xt_ref, wcat_ref, bcat_ref, w2_ref, b2_ref,
                      webt_ref, nf_ref, ae_ref, bt_ref):
    x = x_ref[...]                                            # [TR, E]
    hdim = ae_ref.shape[1]

    # fused x @ [w1 | wea] (+ [b1 | be]): one MXU dot feeds h1 and A
    fused = (jnp.dot(x, wcat_ref[...], preferred_element_type=jnp.float32)
             + bcat_ref[...])                                 # [TR, 2H]

    h1 = jnp.maximum(fused[:, :hdim], 0.0)
    nf_ref[...] = (jnp.dot(h1, w2_ref[...], preferred_element_type=jnp.float32)
                   + b2_ref[...]).astype(nf_ref.dtype)

    # A = x @ wea + be (edge bias folded in)
    ae_ref[...] = fused[:, hdim:2 * hdim].astype(ae_ref.dtype)

    # B^T = web^T @ x^T, emitted lane-dense (node index on the lane axis) so
    # phase 2 never needs a transpose and the store is unmasked width-128.
    bt_ref[...] = jnp.dot(webt_ref[...], xt_ref[...],
                          preferred_element_type=jnp.float32).astype(bt_ref.dtype)


# --------------- phase 2: adjacency block sweep (VPU, lane-dense) --------------
def edge_kernel(ae_ref, bt_ref, we2_ref, be2_ref, adj_ref, acache_ref):
    ri = pl.program_id(0)
    ci = pl.program_id(1)
    row_block, col_block = adj_ref.shape
    hdim = ae_ref.shape[1]
    nsr = row_block // _SUB
    nsc = col_block // _SUB

    # ---- per-row-block A lane-broadcast cache (reused across the col sweep) --
    @pl.when(ci == 0)
    def _fill_a_cache():
        for sr in range(nsr):
            r0 = sr * _SUB
            for hh in range(hdim):
                a_col = ae_ref[r0:r0 + _SUB, hh:hh + 1]               # [SUB, 1]
                acache_ref[hh, r0:r0 + _SUB, :] = jnp.broadcast_to(
                    a_col, (_SUB, _SUB))

    # local diagonal mask (constant; consumed only by diagonal sub-tiles)
    eye = (jax.lax.broadcasted_iota(jnp.int32, (_SUB, _SUB), 0) ==
           jax.lax.broadcasted_iota(jnp.int32, (_SUB, _SUB), 1))
    be2 = be2_ref[0]

    for sr in range(nsr):
        r0 = sr * _SUB
        for sc in range(nsc):
            c0 = sc * _SUB
            acc = jnp.zeros((_SUB, _SUB), jnp.float32)
            # fully-unrolled sweep over the small hidden dim: pure VALU work;
            # a_plane / b_row come straight off the (idle) vld slot.
            for hh in range(hdim):
                a_plane = acache_ref[hh, r0:r0 + _SUB, :]             # [SUB,SUB]
                b_row = bt_ref[hh:hh + 1, c0:c0 + _SUB]               # [1, SUB]
                acc = acc + we2_ref[hh] * jnp.maximum(a_plane + b_row, 0.0)

            # sigmoid via EUP exp + reciprocal (keeps VALU slots free)
            tile = pl.reciprocal(1.0 + jnp.exp(-(acc + be2)), approx=False)

            # zero the diagonal only on sub-tiles that actually contain it
            on_diag = (ri * nsr + sr) == (ci * nsc + sc)

            @pl.when(on_diag)
            def _store_diag(tile=tile, r0=r0, c0=c0):
                adj_ref[r0:r0 + _SUB, c0:c0 + _SUB] = jnp.where(eye, 0.0, tile)

            @pl.when(jnp.logical_not(on_diag))
            def _store_off_diag(tile=tile, r0=r0, c0=c0):
                adj_ref[r0:r0 + _SUB, c0:c0 + _SUB] = tile


# ----------------------------------- wrapper ----------------------------------
def graph_decoder(node_embeddings, params):
    x = node_embeddings.astype(jnp.float32)
    n, edim = x.shape
    hdim = params["w1"].shape[1]

    n_pad = _round_up(n, _SUB)
    x_pad = jnp.pad(x, ((0, n_pad - n), (0, 0)))
    xt_pad = x_pad.T                                   # [E, n_pad] (tiny; lets
    # phase 1 emit B^T lane-dense with a plain MXU matmul, no transposes)

    wcat = jnp.concatenate([params["w1"], params["wea"]], axis=1)   # [E, 2H]
    bcat = jnp.concatenate([params["b1"], params["be"]], axis=1)    # [1, 2H]
    webt = params["web"].T                                          # [H, E]
    w2, b2 = params["w2"], params["b2"]
    we2 = params["we2"].reshape(-1)                                 # [H]
    be2 = params["be2"].reshape(-1)                                 # [1]

    grid_rows = n_pad // _SUB

    def _full(shape):
        nd = len(shape)
        return pl.BlockSpec(shape, lambda r, _nd=nd: (0,) * _nd)

    # ---- phase 1: node features, A, B^T (row-tiled, MXU) ----
    nf_pad, ae, bt = pl.pallas_call(
        precompute_kernel,
        grid=(grid_rows,),
        in_specs=[pl.BlockSpec((_SUB, edim), lambda r: (r, 0)),
                  pl.BlockSpec((edim, _SUB), lambda r: (0, r)),
                  _full(wcat.shape), _full(bcat.shape),
                  _full(w2.shape), _full(b2.shape), _full(webt.shape)],
        out_specs=(pl.BlockSpec((_SUB, edim), lambda r: (r, 0)),
                   pl.BlockSpec((_SUB, hdim), lambda r: (r, 0)),
                   pl.BlockSpec((hdim, _SUB), lambda r: (0, r))),
        out_shape=(jax.ShapeDtypeStruct((n_pad, edim), jnp.float32),
                   jax.ShapeDtypeStruct((n_pad, hdim), jnp.float32),
                   jax.ShapeDtypeStruct((hdim, n_pad), jnp.float32)),
        compiler_params=pltpu.CompilerParams(
            dimension_semantics=("parallel",),
            vmem_limit_bytes=32 * 1024 * 1024),
    )(x_pad, xt_pad, wcat, bcat, w2, b2, webt)

    # ---- phase 2: adjacency.  Large blocks amortize per-grid-step overhead;
    # pick the largest 128-multiples (<=256 rows, <=512 cols) dividing n_pad. ----
    def _pick_block(limit):
        blk = _SUB
        while blk * 2 <= limit and n_pad % (blk * 2) == 0:
            blk *= 2
        return blk

    row_block = _pick_block(256)
    col_block = _pick_block(512)

    adj_pad = pl.pallas_call(
        edge_kernel,
        grid=(n_pad // row_block, n_pad // col_block),
        in_specs=[pl.BlockSpec((row_block, hdim), lambda r, c: (r, 0)),
                  pl.BlockSpec((hdim, col_block), lambda r, c: (0, c)),
                  pl.BlockSpec(memory_space=pltpu.MemorySpace.SMEM),
                  pl.BlockSpec(memory_space=pltpu.MemorySpace.SMEM)],
        out_specs=pl.BlockSpec((row_block, col_block), lambda r, c: (r, c)),
        out_shape=jax.ShapeDtypeStruct((n_pad, n_pad), jnp.float32),
        scratch_shapes=[pltpu.VMEM((hdim, row_block, _SUB), jnp.float32)],
        compiler_params=pltpu.CompilerParams(
            # row axis "parallel" (megacore / v7x 2-TC sharding); col axis
            # "arbitrary" because the A-broadcast cache is filled at ci == 0.
            dimension_semantics=("parallel", "arbitrary"),
            vmem_limit_bytes=32 * 1024 * 1024),
    )(ae, bt, we2, be2)

    # slice away padding (padded rows/cols carry sigmoid(garbage) and are dropped)
    return adj_pad[:n, :n], nf_pad[:n]


# ----------------------- parameter init (deterministic) -----------------------
def init_params(key, embedding_dim, hidden_dim):
    def init_linear(k, fan_in, fan_out):
        k1, k2 = jax.random.split(k)
        bound = 1.0 / np.sqrt(fan_in)
        w = jax.random.uniform(k1, (fan_in, fan_out), jnp.float32, -bound, bound)
        b = jax.random.uniform(k2, (1, fan_out), jnp.float32, -bound, bound)
        return w, b

    k1, k2, k3, k4 = jax.random.split(key, 4)
    w1, b1 = init_linear(k1, embedding_dim, hidden_dim)       # node Linear(E,H)
    w2, b2 = init_linear(k2, hidden_dim, embedding_dim)       # node Linear(H,E)
    we, be = init_linear(k3, 2 * embedding_dim, hidden_dim)   # edge Linear(2E,H)
    we2, be2 = init_linear(k4, hidden_dim, 1)                 # edge Linear(H,1)
    return dict(w1=w1, b1=b1, w2=w2, b2=b2,
                wea=we[:embedding_dim], web=we[embedding_dim:], be=be,
                we2=we2, be2=be2)


# --------------------- exact host-side (float64) reference --------------------
def reference_numpy(x, p):
    x = np.asarray(x, np.float64)
    f64 = lambda k: np.asarray(p[k], np.float64)
    w1, b1, w2, b2 = f64("w1"), f64("b1"), f64("w2"), f64("b2")
    wea, web, be = f64("wea"), f64("web"), f64("be")
    we2, be2 = f64("we2"), f64("be2")

    nf = np.maximum(x @ w1 + b1, 0.0) @ w2 + b2
    a = x @ wea + be                       # edge bias folded into A (as in kernel)
    b = x @ web
    hid = np.maximum(a[:, None, :] + b[None, :, :], 0.0)            # [N, N, H]
    logits = hid @ we2[:, 0] + be2[0, 0]
    adj = 1.0 / (1.0 + np.exp(-logits))
    np.fill_diagonal(adj, 0.0)
    return adj, nf


if __name__ == "__main__":
    num_nodes, embedding_dim, hidden_dim = 8, 32, 32

    key = jax.random.PRNGKey(0)
    k_x, k_p = jax.random.split(key)
    node_embeddings = jax.random.normal(k_x, (num_nodes, embedding_dim), jnp.float32)
    params = init_params(k_p, embedding_dim, hidden_dim)

    adj, nf = graph_decoder(node_embeddings, params)
    adj, nf = jax.block_until_ready((adj, nf))

    adj_ref, nf_ref = reference_numpy(node_embeddings, params)
    np.testing.assert_allclose(np.asarray(nf, np.float64), nf_ref,
                               atol=1e-4, rtol=1e-4)
    np.testing.assert_allclose(np.asarray(adj, np.float64), adj_ref,
                               atol=1e-4, rtol=1e-4)

    print("KERNEL_OK")
</pallas_src>

<mosaic_0001>
module attributes {stable_mosaic.version = 11 : i64} {
  func.func @precompute_kernel(%arg0: i32, %arg1: memref<128x32xf32, #tpu.memory_space<vmem>>, %arg2: memref<32x128xf32, #tpu.memory_space<vmem>>, %arg3: memref<32x64xf32, #tpu.memory_space<vmem>>, %arg4: memref<1x64xf32, #tpu.memory_space<vmem>>, %arg5: memref<32x32xf32, #tpu.memory_space<vmem>>, %arg6: memref<1x32xf32, #tpu.memory_space<vmem>>, %arg7: memref<32x32xf32, #tpu.memory_space<vmem>>, %arg8: memref<128x32xf32, #tpu.memory_space<vmem>>, %arg9: memref<128x32xf32, #tpu.memory_space<vmem>>, %arg10: memref<32x128xf32, #tpu.memory_space<vmem>>) attributes {dimension_semantics = [#tpu.dimension_semantics<parallel>], iteration_bounds = array<i64: 1>, scalar_prefetch = 0 : i64, scratch_operands = 0 : i64, tpu.core_type = #tpu.core_type<tc>, window_params = [{transform_indices = @transform_0, window_bounds = array<i64: 128, 32>}, {transform_indices = @transform_1, window_bounds = array<i64: 32, 128>}, {pipeline_mode = #tpu.pipeline_mode<synchronous>, transform_indices = @transform_2, window_bounds = array<i64: 32, 64>}, {pipeline_mode = #tpu.pipeline_mode<synchronous>, transform_indices = @transform_3, window_bounds = array<i64: 1, 64>}, {pipeline_mode = #tpu.pipeline_mode<synchronous>, transform_indices = @transform_4, window_bounds = array<i64: 32, 32>}, {pipeline_mode = #tpu.pipeline_mode<synchronous>, transform_indices = @transform_5, window_bounds = array<i64: 1, 32>}, {pipeline_mode = #tpu.pipeline_mode<synchronous>, transform_indices = @transform_6, window_bounds = array<i64: 32, 32>}, {transform_indices = @transform_7, window_bounds = array<i64: 128, 32>}, {transform_indices = @transform_8, window_bounds = array<i64: 128, 32>}, {transform_indices = @transform_9, window_bounds = array<i64: 32, 128>}]} {
    %c0 = arith.constant 0 : index
    %c0_0 = arith.constant 0 : index
    %0 = vector.load %arg1[%c0, %c0_0] : memref<128x32xf32, #tpu.memory_space<vmem>>, vector<128x32xf32>
    %c0_1 = arith.constant 0 : index
    %c0_2 = arith.constant 0 : index
    %1 = vector.load %arg3[%c0_1, %c0_2] : memref<32x64xf32, #tpu.memory_space<vmem>>, vector<32x64xf32>
    %cst = arith.constant dense<0.000000e+00> : vector<128x64xf32>
    %2 = tpu.matmul %0, %1, %cst {dimension_numbers = #tpu.dot_dimension_numbers<[1], [0], [0], [1], [0, 0, 1, 1], [], []>} : vector<128x32xf32>, vector<32x64xf32>, vector<128x64xf32> -> vector<128x64xf32>
    %c0_3 = arith.constant 0 : index
    %c0_4 = arith.constant 0 : index
    %3 = vector.load %arg4[%c0_3, %c0_4] : memref<1x64xf32, #tpu.memory_space<vmem>>, vector<1x64xf32>
    %4 = vector.broadcast %3 : vector<1x64xf32> to vector<128x64xf32>
    %5 = arith.addf %2, %4 : vector<128x64xf32>
    %6 = vector.extract_strided_slice %5 {offsets = [0, 0], sizes = [128, 32], strides = [1, 1]} : vector<128x64xf32> to vector<128x32xf32>
    %cst_5 = arith.constant 0.000000e+00 : f32
    %7 = vector.broadcast %cst_5 : f32 to vector<128x32xf32>
    %8 = arith.maximumf %6, %7 : vector<128x32xf32>
    %c0_6 = arith.constant 0 : index
    %c0_7 = arith.constant 0 : index
    %9 = vector.load %arg5[%c0_6, %c0_7] : memref<32x32xf32, #tpu.memory_space<vmem>>, vector<32x32xf32>
    %cst_8 = arith.constant dense<0.000000e+00> : vector<128x32xf32>
    %10 = tpu.matmul %8, %9, %cst_8 {dimension_numbers = #tpu.dot_dimension_numbers<[1], [0], [0], [1], [0, 0, 1, 1], [], []>} : vector<128x32xf32>, vector<32x32xf32>, vector<128x32xf32> -> vector<128x32xf32>
    %c0_9 = arith.constant 0 : index
    %c0_10 = arith.constant 0 : index
    %11 = vector.load %arg6[%c0_9, %c0_10] : memref<1x32xf32, #tpu.memory_space<vmem>>, vector<1x32xf32>
    %12 = vector.broadcast %11 : vector<1x32xf32> to vector<128x32xf32>
    %13 = arith.addf %10, %12 : vector<128x32xf32>
    %c0_11 = arith.constant 0 : index
    %c0_12 = arith.constant 0 : index
    %14 = vector.load %arg8[%c0_11, %c0_12] : memref<128x32xf32, #tpu.memory_space<vmem>>, vector<128x32xf32>
    tpu.vector_store %arg8[%c0_11, %c0_12], %13 {strides = array<i32>} : memref<128x32xf32, #tpu.memory_space<vmem>>, vector<128x32xf32>,
    %15 = vector.extract_strided_slice %5 {offsets = [0, 32], sizes = [128, 32], strides = [1, 1]} : vector<128x64xf32> to vector<128x32xf32>
    %c0_13 = arith.constant 0 : index
    %c0_14 = arith.constant 0 : index
    %16 = vector.load %arg9[%c0_13, %c0_14] : memref<128x32xf32, #tpu.memory_space<vmem>>, vector<128x32xf32>
    tpu.vector_store %arg9[%c0_13, %c0_14], %15 {strides = array<i32>} : memref<128x32xf32, #tpu.memory_space<vmem>>, vector<128x32xf32>,
    %c0_15 = arith.constant 0 : index
    %c0_16 = arith.constant 0 : index
    %17 = vector.load %arg7[%c0_15, %c0_16] : memref<32x32xf32, #tpu.memory_space<vmem>>, vector<32x32xf32>
    %c0_17 = arith.constant 0 : index
    %c0_18 = arith.constant 0 : index
    %18 = vector.load %arg2[%c0_17, %c0_18] : memref<32x128xf32, #tpu.memory_space<vmem>>, vector<32x128xf32>
    %cst_19 = arith.constant dense<0.000000e+00> : vector<32x128xf32>
    %19 = tpu.matmul %17, %18, %cst_19 {dimension_numbers = #tpu.dot_dimension_numbers<[1], [0], [0], [1], [0, 0, 1, 1], [], []>} : vector<32x32xf32>, vector<32x128xf32>, vector<32x128xf32> -> vector<32x128xf32>
    %c0_20 = arith.constant 0 : index
    %c0_21 = arith.constant 0 : index
    %20 = vector.load %arg10[%c0_20, %c0_21] : memref<32x128xf32, #tpu.memory_space<vmem>>, vector<32x128xf32>
    tpu.vector_store %arg10[%c0_20, %c0_21], %19 {strides = array<i32>} : memref<32x128xf32, #tpu.memory_space<vmem>>, vector<32x128xf32>,
    return
  }
  func.func @transform_0(%arg0: i32) -> (i32, i32) {
    %c0_i32 = arith.constant 0 : i32
    %c0_i32_0 = arith.constant 0 : i32
    return %arg0, %c0_i32 : i32, i32
  }
  func.func @transform_1(%arg0: i32) -> (i32, i32) {
    %c0_i32 = arith.constant 0 : i32
    %c0_i32_0 = arith.constant 0 : i32
    return %c0_i32, %arg0 : i32, i32
  }
  func.func @transform_2(%arg0: i32) -> (i32, i32) {
    %c0_i32 = arith.constant 0 : i32
    %c0_i32_0 = arith.constant 0 : i32
    %c0_i32_1 = arith.constant 0 : i32
    return %c0_i32, %c0_i32_0 : i32, i32
  }
  func.func @transform_3(%arg0: i32) -> (i32, i32) {
    %c0_i32 = arith.constant 0 : i32
    %c0_i32_0 = arith.constant 0 : i32
    %c0_i32_1 = arith.constant 0 : i32
    return %c0_i32, %c0_i32_0 : i32, i32
  }
  func.func @transform_4(%arg0: i32) -> (i32, i32) {
    %c0_i32 = arith.constant 0 : i32
    %c0_i32_0 = arith.constant 0 : i32
    %c0_i32_1 = arith.constant 0 : i32
    return %c0_i32, %c0_i32_0 : i32, i32
  }
  func.func @transform_5(%arg0: i32) -> (i32, i32) {
    %c0_i32 = arith.constant 0 : i32
    %c0_i32_0 = arith.constant 0 : i32
    %c0_i32_1 = arith.constant 0 : i32
    return %c0_i32, %c0_i32_0 : i32, i32
  }
  func.func @transform_6(%arg0: i32) -> (i32, i32) {
    %c0_i32 = arith.constant 0 : i32
    %c0_i32_0 = arith.constant 0 : i32
    %c0_i32_1 = arith.constant 0 : i32
    return %c0_i32, %c0_i32_0 : i32, i32
  }
  func.func @transform_7(%arg0: i32) -> (i32, i32) {
    %c0_i32 = arith.constant 0 : i32
    %c0_i32_0 = arith.constant 0 : i32
    return %arg0, %c0_i32 : i32, i32
  }
  func.func @transform_8(%arg0: i32) -> (i32, i32) {
    %c0_i32 = arith.constant 0 : i32
    %c0_i32_0 = arith.constant 0 : i32
    return %arg0, %c0_i32 : i32, i32
  }
  func.func @transform_9(%arg0: i32) -> (i32, i32) {
    %c0_i32 = arith.constant 0 : i32
    %c0_i32_0 = arith.constant 0 : i32
    return %c0_i32, %arg0 : i32, i32
  }
}

</mosaic_0001>

<llo_original>
// kernel: tpu_custom_call.1
$region0: #{tpu_custom_call.1}
  #allocation0 [shape = 'u32[]', space=smem, size = 0x4, offset = 0x4, fixed_abs, tag = 'smem constant byte address 0x4 - core index']
  #allocation1 [shape = 'u32[144,128]{1,0:T(1,128)}', space=vmem, size = 0x12000, scoped, tag = 'internal scratch']
  %s0 = inlined_call_operand.vmem [shape: f32[128,32], index: 0, kind: input, shape index: {}]
  %s1 = inlined_call_operand.vmem [shape: f32[32,128], index: 1, kind: input, shape index: {}]
  %s2 = inlined_call_operand.vmem [shape: f32[32,64], index: 2, kind: input, shape index: {}]
  %s3 = inlined_call_operand.vmem [shape: f32[1,64], index: 3, kind: input, shape index: {}]
  %s4 = inlined_call_operand.vmem [shape: f32[32,32], index: 4, kind: input, shape index: {}]
  %s5 = inlined_call_operand.vmem [shape: f32[1,32], index: 5, kind: input, shape index: {}]
  %s6 = inlined_call_operand.vmem [shape: f32[32,32], index: 6, kind: input, shape index: {}]
  %s7 = inlined_call_operand.vmem [shape: f32[128,32], index: 7, kind: output, shape index: {0}]
  %s8 = inlined_call_operand.vmem [shape: f32[128,32], index: 8, kind: output, shape index: {1}]
  %s9 = inlined_call_operand.hbm [shape: f32[32,128], index: 9, kind: output, shape index: {2}]
  %10 = xla_tuple %s7, %s8, %s9
  %s11 = sld [smem:[#allocation0]]
  $region54: #{tpu_custom_call.1} parent=0
    _
  %s13 = ssub.s32 1, %s11
  %s14 = scalar_select 0, %s13, %s11
  $region1: #{tpu_custom_call.1} parent=0
    #allocation2 [shape = 'u8[16384]{0}', space=vmem, size = 0x4000, scoped, tag = 'output window, operand 2, single buffered']
    #allocation3 [shape = 's32[1]{0}', space=sflag, size = 0x4, scoped, tag = 'scoped memory for tpu_custom_call.1']
    %15 = vsyncpa [#allocation3], 0
    // Predicated region
    $region2: #{tpu_custom_call.1} parent=1 // pred_check
      _
    $region3: #{tpu_custom_call.1} parent=1 // pred_check_branch
      %17 = sbr.rel (0) target = $region5
    $region4: #{tpu_custom_call.1} parent=1 // pred_region
      _
    $region5: #{tpu_custom_call.1} parent=1 // pred_fallthru
      _
    // Predicated region
    $region6: #{tpu_custom_call.1} parent=1 // pred_check
      _
    $region7: #{tpu_custom_call.1} parent=1 // pred_check_branch
      %19 = sbr.rel (0) target = $region9
    $region8: #{tpu_custom_call.1} parent=1 // pred_region
      _
    $region9: #{tpu_custom_call.1} parent=1 // pred_fallthru
      _
    // Predicated region
    $region10: #{tpu_custom_call.1} parent=1 // pred_check
      _
    $region11: #{tpu_custom_call.1} parent=1 // pred_check_branch
      %21 = sbr.rel (0) target = $region13
    $region12: #{tpu_custom_call.1} parent=1 // pred_region
      _
    $region13: #{tpu_custom_call.1} parent=1 // pred_fallthru
      _
    // Predicated region
    $region14: #{tpu_custom_call.1} parent=1 // pred_check
      _
    $region15: #{tpu_custom_call.1} parent=1 // pred_check_branch
      %23 = sbr.rel (0) target = $region17
    $region16: #{tpu_custom_call.1} parent=1 // pred_region
      _
    $region17: #{tpu_custom_call.1} parent=1 // pred_fallthru
      _
    // Predicated region
    $region18: #{tpu_custom_call.1} parent=1 // pred_check
      _
    $region19: #{tpu_custom_call.1} parent=1 // pred_check_branch
      %25 = sbr.rel (0) target = $region21
    $region20: #{tpu_custom_call.1} parent=1 // pred_region
      _
    $region21: #{tpu_custom_call.1} parent=1 // pred_fallthru
      _
    // Predicated region
    $region22: #{tpu_custom_call.1} parent=1 // pred_check
      _
    $region23: #{tpu_custom_call.1} parent=1 // pred_check_branch
      %27 = sbr.rel (0) target = $region25
    $region24: #{tpu_custom_call.1} parent=1 // pred_region
      _
    $region25: #{tpu_custom_call.1} parent=1 // pred_fallthru
      _
    // Predicated region
    $region26: #{tpu_custom_call.1} parent=1 // pred_check
      _
    $region27: #{tpu_custom_call.1} parent=1 // pred_check_branch
      %29 = sbr.rel (0) target = $region29
    $region28: #{tpu_custom_call.1} parent=1 // pred_region
      _
    $region29: #{tpu_custom_call.1} parent=1 // pred_fallthru
      _
    %v30 = vld [vmem:[%s0] sm:$0xff]
    %v31 = vld [vmem:[%s0 + $0x8] sm:$0xff]
    %v32 = vld [vmem:[%s0 + $0x10] sm:$0xff]
    %v33 = vld [vmem:[%s0 + $0x18] sm:$0xff]
    %v34 = vld [vmem:[%s0 + $0x20] sm:$0xff]
    %v35 = vld [vmem:[%s0 + $0x28] sm:$0xff]
    %v36 = vld [vmem:[%s0 + $0x30] sm:$0xff]
    %v37 = vld [vmem:[%s0 + $0x38] sm:$0xff]
    %v38 = vld [vmem:[%s0 + $0x40] sm:$0xff]
    %v39 = vld [vmem:[%s0 + $0x48] sm:$0xff]
    %v40 = vld [vmem:[%s0 + $0x50] sm:$0xff]
    %v41 = vld [vmem:[%s0 + $0x58] sm:$0xff]
    %v42 = vld [vmem:[%s0 + $0x60] sm:$0xff]
    %v43 = vld [vmem:[%s0 + $0x68] sm:$0xff]
    %v44 = vld [vmem:[%s0 + $0x70] sm:$0xff]
    %v45 = vld [vmem:[%s0 + $0x78] sm:$0xff]
    %v46 = vld [vmem:[%s2] sm:$0xff]
    %v47 = vld [vmem:[%s2 + $0x8] sm:$0xff]
    %v48 = vld [vmem:[%s2 + $0x10] sm:$0xff]
    %v49 = vld [vmem:[%s2 + $0x18] sm:$0xff]
    %v50 = vld [vmem:[%s3] sm:$0x1]
    %v52 = vlaneseq
    %v53 = vshrl.u32 %v52, 7
    %v54 = vsub.s32 0, %v53
    %v55 = vrot.slane %v50, %v54
    %vm57 = vcmask 261120
    %v59 = vsel %vm57, %v30, 0
    %v62 = vsel %vm57, %v31, 0
    %v65 = vsel %vm57, %v32, 0
    %v68 = vsel %vm57, %v33, 0
    %v71 = vsel %vm57, %v34, 0
    %v74 = vsel %vm57, %v35, 0
    %v77 = vsel %vm57, %v36, 0
    %v80 = vsel %vm57, %v37, 0
    %v83 = vsel %vm57, %v38, 0
    %v86 = vsel %vm57, %v39, 0
    %v89 = vsel %vm57, %v40, 0
    %v92 = vsel %vm57, %v41, 0
    %v95 = vsel %vm57, %v42, 0
    %v98 = vsel %vm57, %v43, 0
    %v101 = vsel %vm57, %v44, 0
    %v104 = vsel %vm57, %v45, 0
    %106 = vmatprep.subr.mxu0 0.0
    %107 = vmatpush1.msra.mxu0 %v46
    %108 = vmatprep.subr.mxu0 0.0
    %109 = vmatpush1.msra.mxu0 %v47
    %110 = vmatprep.subr.mxu0 0.0
    %111 = vmatpush1.msra.mxu0 %v48
    %112 = vmatprep.subr.mxu0 0.0
    %113 = vmatpush1.msra.mxu0 %v49
    %114 = vmatprep.subr.mxu0 0.0
    %115 = vmatpush1.msra.mxu0 0.0
    %116 = vmatprep.subr.mxu0 0.0
    %117 = vmatpush1.msra.mxu0 0.0
    %118 = vmatprep.subr.mxu0 0.0
    %119 = vmatpush1.msra.mxu0 0.0
    %120 = vmatprep.subr.mxu0 0.0
    %121 = vmatpush1.msra.mxu0 0.0
    %122 = vmatprep.subr.mxu0 0.0
    %123 = vmatpush1.msra.mxu0 0.0
    %124 = vmatprep.subr.mxu0 0.0
    %125 = vmatpush1.msra.mxu0 0.0
    %126 = vmatprep.subr.mxu0 0.0
    %127 = vmatpush1.msra.mxu0 0.0
    %128 = vmatprep.subr.mxu0 0.0
    %129 = vmatpush1.msra.mxu0 0.0
    %130 = vmatprep.subr.mxu0 0.0
    %131 = vmatpush1.msra.mxu0 0.0
    %132 = vmatprep.subr.mxu0 0.0
    %133 = vmatpush1.msra.mxu0 0.0
    %134 = vmatprep.subr.mxu0 0.0
    %135 = vmatpush1.msra.mxu0 0.0
    %136 = vmatprep.subr.mxu0 0.0
    %137 = vmatpush1.msra.mxu0 0.0
    %138 = vmatprep.subr.mxu0 0.0
    %139 = vmatpush1.msra.mxu0 0.0
    %140 = vmatprep.subr.mxu0 0.0
    %141 = vmatpush1.msra.mxu0 0.0
    %142 = vmatprep.subr.mxu0 0.0
    %143 = vmatpush1.msra.mxu0 0.0
    %144 = vmatprep.subr.mxu0 0.0
    %145 = vmatpush1.msra.mxu0 0.0
    %146 = vmatprep.subr.mxu0 0.0
    %147 = vmatpush1.msra.mxu0 0.0
    %148 = vmatprep.subr.mxu0 0.0
    %149 = vmatpush1.msra.mxu0 0.0
    %150 = vmatprep.subr.mxu0 0.0
    %151 = vmatpush1.msra.mxu0 0.0
    %152 = vmatprep.subr.mxu0 0.0
    %153 = vmatpush1.msra.mxu0 0.0
    %154 = vmatprep.subr.mxu0 0.0
    %155 = vmatpush1.msra.mxu0 0.0
    %156 = vmatprep.subr.mxu0 0.0
    %157 = vmatpush1.msra.mxu0 0.0
    %158 = vmatprep.subr.mxu0 0.0
    %159 = vmatpush1.msra.mxu0 0.0
    %160 = vmatprep.subr.mxu0 0.0
    %161 = vmatpush1.msra.mxu0 0.0
    %162 = vmatprep.subr.mxu0 0.0
    %163 = vmatpush1.msra.mxu0 0.0
    %164 = vmatprep.subr.mxu0 0.0
    %165 = vmatpush1.msra.mxu0 0.0
    %166 = vmatprep.subr.mxu0 0.0
    %167 = vmatpush1.msra.mxu0 0.0
    %168 = vmatprep.subr.mxu0 0.0
    %169 = vmatpush1.msra.mxu0 0.0
    %170 = vmatprep.mubr.f32.mxu0 0.0
    %171 = vmatmul.mubr.f32.gmra.mrb[0].mxu0 %v59
    %v172 = vpop.f32.mrb[0].mxu0
    %v173 = vadd.f32 %v55, %v172
    %v174 = vpop.f32.mrb[0].mxu0
    %175 = vmatprep.mubr.f32.mxu0 0.0
    %176 = vmatmul.mubr.f32.gmra.mrb[0].mxu0 %v62
    %v177 = vpop.f32.mrb[0].mxu0
    %v178 = vadd.f32 %v55, %v177
    %v179 = vpop.f32.mrb[0].mxu0
    %180 = vmatprep.mubr.f32.mxu0 0.0
    %181 = vmatmul.mubr.f32.gmra.mrb[0].mxu0 %v65
    %v182 = vpop.f32.mrb[0].mxu0
    %v183 = vadd.f32 %v55, %v182
    %v184 = vpop.f32.mrb[0].mxu0
    %185 = vmatprep.mubr.f32.mxu0 0.0
    %186 = vmatmul.mubr.f32.gmra.mrb[0].mxu0 %v68
    %v187 = vpop.f32.mrb[0].mxu0
    %v188 = vadd.f32 %v55, %v187
    %v189 = vpop.f32.mrb[0].mxu0
    %190 = vmatprep.mubr.f32.mxu0 0.0
    %191 = vmatmul.mubr.f32.gmra.mrb[0].mxu0 %v71
    %v192 = vpop.f32.mrb[0].mxu0
    %v193 = vadd.f32 %v55, %v192
    %v194 = vpop.f32.mrb[0].mxu0
    %195 = vmatprep.mubr.f32.mxu0 0.0
    %196 = vmatmul.mubr.f32.gmra.mrb[0].mxu0 %v74
    %v197 = vpop.f32.mrb[0].mxu0
    %v198 = vadd.f32 %v55, %v197
    %v199 = vpop.f32.mrb[0].mxu0
    %200 = vmatprep.mubr.f32.mxu0 0.0
    %201 = vmatmul.mubr.f32.gmra.mrb[0].mxu0 %v77
    %v202 = vpop.f32.mrb[0].mxu0
    %v203 = vadd.f32 %v55, %v202
    %v204 = vpop.f32.mrb[0].mxu0
    %205 = vmatprep.mubr.f32.mxu0 0.0
    %206 = vmatmul.mubr.f32.gmra.mrb[0].mxu0 %v80
    %v207 = vpop.f32.mrb[0].mxu0
    %v208 = vadd.f32 %v55, %v207
    %v209 = vpop.f32.mrb[0].mxu0
    %210 = vmatprep.mubr.f32.mxu0 0.0
    %211 = vmatmul.mubr.f32.gmra.mrb[0].mxu0 %v83
    %v212 = vpop.f32.mrb[0].mxu0
    %v213 = vadd.f32 %v55, %v212
    %v214 = vpop.f32.mrb[0].mxu0
    %215 = vmatprep.mubr.f32.mxu0 0.0
    %216 = vmatmul.mubr.f32.gmra.mrb[0].mxu0 %v86
    %v217 = vpop.f32.mrb[0].mxu0
    %v218 = vadd.f32 %v55, %v217
    %v219 = vpop.f32.mrb[0].mxu0
    %220 = vmatprep.mubr.f32.mxu0 0.0
    %221 = vmatmul.mubr.f32.gmra.mrb[0].mxu0 %v89
    %v222 = vpop.f32.mrb[0].mxu0
    %v223 = vadd.f32 %v55, %v222
    %v224 = vpop.f32.mrb[0].mxu0
    %225 = vmatprep.mubr.f32.mxu0 0.0
    %226 = vmatmul.mubr.f32.gmra.mrb[0].mxu0 %v92
    %v227 = vpop.f32.mrb[0].mxu0
    %v228 = vadd.f32 %v55, %v227
    %v229 = vpop.f32.mrb[0].mxu0
    %230 = vmatprep.mubr.f32.mxu0 0.0
    %231 = vmatmul.mubr.f32.gmra.mrb[0].mxu0 %v95
    %v232 = vpop.f32.mrb[0].mxu0
    %v233 = vadd.f32 %v55, %v232
    %v234 = vpop.f32.mrb[0].mxu0
    %235 = vmatprep.mubr.f32.mxu0 0.0
    %236 = vmatmul.mubr.f32.gmra.mrb[0].mxu0 %v98
    %v237 = vpop.f32.mrb[0].mxu0
    %v238 = vadd.f32 %v55, %v237
    %v239 = vpop.f32.mrb[0].mxu0
    %240 = vmatprep.mubr.f32.mxu0 0.0
    %241 = vmatmul.mubr.f32.gmra.mrb[0].mxu0 %v101
    %v242 = vpop.f32.mrb[0].mxu0
    %v243 = vadd.f32 %v55, %v242
    %v244 = vpop.f32.mrb[0].mxu0
    %245 = vmatprep.mubr.f32.mxu0 0.0
    %246 = vmatmul.mubr.f32.gmra.mrb[0].mxu0 %v104
    %v247 = vpop.f32.mrb[0].mxu0
    %v248 = vadd.f32 %v55, %v247
    %v249 = vpop.f32.mrb[0].mxu0
    %250 = vdwg.mxu0
    %v251 = vmax.f32 %v173, 0.0
    %v252 = vmax.f32 %v178, 0.0
    %v253 = vmax.f32 %v183, 0.0
    %v254 = vmax.f32 %v188, 0.0
    %v255 = vmax.f32 %v193, 0.0
    %v256 = vmax.f32 %v198, 0.0
    %v257 = vmax.f32 %v203, 0.0
    %v258 = vmax.f32 %v208, 0.0
    %v259 = vmax.f32 %v213, 0.0
    %v260 = vmax.f32 %v218, 0.0
    %v261 = vmax.f32 %v223, 0.0
    %v262 = vmax.f32 %v228, 0.0
    %v263 = vmax.f32 %v233, 0.0
    %v264 = vmax.f32 %v238, 0.0
    %v265 = vmax.f32 %v243, 0.0
    %v266 = vmax.f32 %v248, 0.0
    %v267 = vld [vmem:[%s4] sm:$0xff]
    %v268 = vld [vmem:[%s4 + $0x8] sm:$0xff]
    %v269 = vld [vmem:[%s4 + $0x10] sm:$0xff]
    %v270 = vld [vmem:[%s4 + $0x18] sm:$0xff]
    %v271 = vld [vmem:[%s5] sm:$0x1]
    %v273 = vlaneseq
    %v274 = vshrl.u32 %v273, 7
    %v275 = vsub.s32 0, %v274
    %v276 = vrot.slane %v271, %v275
    %v279 = vsel %vm57, %v251, 0
    %v282 = vsel %vm57, %v252, 0
    %v285 = vsel %vm57, %v253, 0
    %v288 = vsel %vm57, %v254, 0
    %v291 = vsel %vm57, %v255, 0
    %v294 = vsel %vm57, %v256, 0
    %v297 = vsel %vm57, %v257, 0
    %v300 = vsel %vm57, %v258, 0
    %v303 = vsel %vm57, %v259, 0
    %v306 = vsel %vm57, %v260, 0
    %v309 = vsel %vm57, %v261, 0
    %v312 = vsel %vm57, %v262, 0
    %v315 = vsel %vm57, %v263, 0
    %v318 = vsel %vm57, %v264, 0
    %v321 = vsel %vm57, %v265, 0
    %v324 = vsel %vm57, %v266, 0
    %326 = vmatprep.subr.mxu0 0.0
    %327 = vmatpush1.msra.mxu0 %v267
    %328 = vmatprep.subr.mxu0 0.0
    %329 = vmatpush1.msra.mxu0 %v268
    %330 = vmatprep.subr.mxu0 0.0
    %331 = vmatpush1.msra.mxu0 %v269
    %332 = vmatprep.subr.mxu0 0.0
    %333 = vmatpush1.msra.mxu0 %v270
    %334 = vmatprep.subr.mxu0 0.0
    %335 = vmatpush1.msra.mxu0 0.0
    %336 = vmatprep.subr.mxu0 0.0
    %337 = vmatpush1.msra.mxu0 0.0
    %338 = vmatprep.subr.mxu0 0.0
    %339 = vmatpush1.msra.mxu0 0.0
    %340 = vmatprep.subr.mxu0 0.0
    %341 = vmatpush1.msra.mxu0 0.0
    %342 = vmatprep.subr.mxu0 0.0
    %343 = vmatpush1.msra.mxu0 0.0
    %344 = vmatprep.subr.mxu0 0.0
    %345 = vmatpush1.msra.mxu0 0.0
    %346 = vmatprep.subr.mxu0 0.0
    %347 = vmatpush1.msra.mxu0 0.0
    %348 = vmatprep.subr.mxu0 0.0
    %349 = vmatpush1.msra.mxu0 0.0
    %350 = vmatprep.subr.mxu0 0.0
    %351 = vmatpush1.msra.mxu0 0.0
    %352 = vmatprep.subr.mxu0 0.0
    %353 = vmatpush1.msra.mxu0 0.0
    %354 = vmatprep.subr.mxu0 0.0
    %355 = vmatpush1.msra.mxu0 0.0
    %356 = vmatprep.subr.mxu0 0.0
    %357 = vmatpush1.msra.mxu0 0.0
    %358 = vmatprep.subr.mxu0 0.0
    %359 = vmatpush1.msra.mxu0 0.0
    %360 = vmatprep.subr.mxu0 0.0
    %361 = vmatpush1.msra.mxu0 0.0
    %362 = vmatprep.subr.mxu0 0.0
    %363 = vmatpush1.msra.mxu0 0.0
    %364 = vmatprep.subr.mxu0 0.0
    %365 = vmatpush1.msra.mxu0 0.0
    %366 = vmatprep.subr.mxu0 0.0
    %367 = vmatpush1.msra.mxu0 0.0
    %368 = vmatprep.subr.mxu0 0.0
    %369 = vmatpush1.msra.mxu0 0.0
    %370 = vmatprep.subr.mxu0 0.0
    %371 = vmatpush1.msra.mxu0 0.0
    %372 = vmatprep.subr.mxu0 0.0
    %373 = vmatpush1.msra.mxu0 0.0
    %374 = vmatprep.subr.mxu0 0.0
    %375 = vmatpush1.msra.mxu0 0.0
    %376 = vmatprep.subr.mxu0 0.0
    %377 = vmatpush1.msra.mxu0 0.0
    %378 = vmatprep.subr.mxu0 0.0
    %379 = vmatpush1.msra.mxu0 0.0
    %380 = vmatprep.subr.mxu0 0.0
    %381 = vmatpush1.msra.mxu0 0.0
    %382 = vmatprep.subr.mxu0 0.0
    %383 = vmatpush1.msra.mxu0 0.0
    %384 = vmatprep.subr.mxu0 0.0
    %385 = vmatpush1.msra.mxu0 0.0
    %386 = vmatprep.subr.mxu0 0.0
    %387 = vmatpush1.msra.mxu0 0.0
    %388 = vmatprep.subr.mxu0 0.0
    %389 = vmatpush1.msra.mxu0 0.0
    %390 = vmatprep.mubr.f32.mxu0 0.0
    %391 = vmatmul.mubr.f32.gmra.mrb[0].mxu0 %v279
    %v392 = vpop.f32.mrb[0].mxu0
    %v393 = vadd.f32 %v276, %v392
    %v394 = vpop.f32.mrb[0].mxu0
    %395 = vmatprep.mubr.f32.mxu0 0.0
    %396 = vmatmul.mubr.f32.gmra.mrb[0].mxu0 %v282
    %v397 = vpop.f32.mrb[0].mxu0
    %v398 = vadd.f32 %v276, %v397
    %v399 = vpop.f32.mrb[0].mxu0
    %400 = vmatprep.mubr.f32.mxu0 0.0
    %401 = vmatmul.mubr.f32.gmra.mrb[0].mxu0 %v285
    %v402 = vpop.f32.mrb[0].mxu0
    %v403 = vadd.f32 %v276, %v402
    %v404 = vpop.f32.mrb[0].mxu0
    %405 = vmatprep.mubr.f32.mxu0 0.0
    %406 = vmatmul.mubr.f32.gmra.mrb[0].mxu0 %v288
    %v407 = vpop.f32.mrb[0].mxu0
    %v408 = vadd.f32 %v276, %v407
    %v409 = vpop.f32.mrb[0].mxu0
    %410 = vmatprep.mubr.f32.mxu0 0.0
    %411 = vmatmul.mubr.f32.gmra.mrb[0].mxu0 %v291
    %v412 = vpop.f32.mrb[0].mxu0
    %v413 = vadd.f32 %v276, %v412
    %v414 = vpop.f32.mrb[0].mxu0
    %415 = vmatprep.mubr.f32.mxu0 0.0
    %416 = vmatmul.mubr.f32.gmra.mrb[0].mxu0 %v294
    %v417 = vpop.f32.mrb[0].mxu0
    %v418 = vadd.f32 %v276, %v417
    %v419 = vpop.f32.mrb[0].mxu0
    %420 = vmatprep.mubr.f32.mxu0 0.0
    %421 = vmatmul.mubr.f32.gmra.mrb[0].mxu0 %v297
    %v422 = vpop.f32.mrb[0].mxu0
    %v423 = vadd.f32 %v276, %v422
    %v424 = vpop.f32.mrb[0].mxu0
    %425 = vmatprep.mubr.f32.mxu0 0.0
    %426 = vmatmul.mubr.f32.gmra.mrb[0].mxu0 %v300
    %v427 = vpop.f32.mrb[0].mxu0
    %v428 = vadd.f32 %v276, %v427
    %v429 = vpop.f32.mrb[0].mxu0
    %430 = vmatprep.mubr.f32.mxu0 0.0
    %431 = vmatmul.mubr.f32.gmra.mrb[0].mxu0 %v303
    %v432 = vpop.f32.mrb[0].mxu0
    %v433 = vadd.f32 %v276, %v432
    %v434 = vpop.f32.mrb[0].mxu0
    %435 = vmatprep.mubr.f32.mxu0 0.0
    %436 = vmatmul.mubr.f32.gmra.mrb[0].mxu0 %v306
    %v437 = vpop.f32.mrb[0].mxu0
    %v438 = vadd.f32 %v276, %v437
    %v439 = vpop.f32.mrb[0].mxu0
    %440 = vmatprep.mubr.f32.mxu0 0.0
    %441 = vmatmul.mubr.f32.gmra.mrb[0].mxu0 %v309
    %v442 = vpop.f32.mrb[0].mxu0
    %v443 = vadd.f32 %v276, %v442
    %v444 = vpop.f32.mrb[0].mxu0
    %445 = vmatprep.mubr.f32.mxu0 0.0
    %446 = vmatmul.mubr.f32.gmra.mrb[0].mxu0 %v312
    %v447 = vpop.f32.mrb[0].mxu0
    %v448 = vadd.f32 %v276, %v447
    %v449 = vpop.f32.mrb[0].mxu0
    %450 = vmatprep.mubr.f32.mxu0 0.0
    %451 = vmatmul.mubr.f32.gmra.mrb[0].mxu0 %v315
    %v452 = vpop.f32.mrb[0].mxu0
    %v453 = vadd.f32 %v276, %v452
    %v454 = vpop.f32.mrb[0].mxu0
    %455 = vmatprep.mubr.f32.mxu0 0.0
    %456 = vmatmul.mubr.f32.gmra.mrb[0].mxu0 %v318
    %v457 = vpop.f32.mrb[0].mxu0
    %v458 = vadd.f32 %v276, %v457
    %v459 = vpop.f32.mrb[0].mxu0
    %460 = vmatprep.mubr.f32.mxu0 0.0
    %461 = vmatmul.mubr.f32.gmra.mrb[0].mxu0 %v321
    %v462 = vpop.f32.mrb[0].mxu0
    %v463 = vadd.f32 %v276, %v462
    %v464 = vpop.f32.mrb[0].mxu0
    %465 = vmatprep.mubr.f32.mxu0 0.0
    %466 = vmatmul.mubr.f32.gmra.mrb[0].mxu0 %v324
    %v467 = vpop.f32.mrb[0].mxu0
    %v468 = vadd.f32 %v276, %v467
    %v469 = vpop.f32.mrb[0].mxu0
    %470 = vdwg.mxu0
    %471 = vst.msk [vmem:[%s7] sm:$0xff] %vm57, %v393
    %472 = vst.msk [vmem:[%s7 + $0x8] sm:$0xff] %vm57, %v398
    %473 = vst.msk [vmem:[%s7 + $0x10] sm:$0xff] %vm57, %v403
    %474 = vst.msk [vmem:[%s7 + $0x18] sm:$0xff] %vm57, %v408
    %475 = vst.msk [vmem:[%s7 + $0x20] sm:$0xff] %vm57, %v413
    %476 = vst.msk [vmem:[%s7 + $0x28] sm:$0xff] %vm57, %v418
    %477 = vst.msk [vmem:[%s7 + $0x30] sm:$0xff] %vm57, %v423
    %478 = vst.msk [vmem:[%s7 + $0x38] sm:$0xff] %vm57, %v428
    %479 = vst.msk [vmem:[%s7 + $0x40] sm:$0xff] %vm57, %v433
    %480 = vst.msk [vmem:[%s7 + $0x48] sm:$0xff] %vm57, %v438
    %481 = vst.msk [vmem:[%s7 + $0x50] sm:$0xff] %vm57, %v443
    %482 = vst.msk [vmem:[%s7 + $0x58] sm:$0xff] %vm57, %v448
    %483 = vst.msk [vmem:[%s7 + $0x60] sm:$0xff] %vm57, %v453
    %484 = vst.msk [vmem:[%s7 + $0x68] sm:$0xff] %vm57, %v458
    %485 = vst.msk [vmem:[%s7 + $0x70] sm:$0xff] %vm57, %v463
    %486 = vst.msk [vmem:[%s7 + $0x78] sm:$0xff] %vm57, %v468
    %503 = vrot.lane.b32.xlu0 %v173, 96
    %v504 = vpop.permute.xlu0 %503
    %505 = vrot.lane.b32.xlu0 %v178, 96
    %v506 = vpop.permute.xlu0 %505
    %507 = vrot.lane.b32.xlu0 %v183, 96
    %v508 = vpop.permute.xlu0 %507
    %509 = vrot.lane.b32.xlu0 %v188, 96
    %v510 = vpop.permute.xlu0 %509
    %511 = vrot.lane.b32.xlu0 %v193, 96
    %v512 = vpop.permute.xlu0 %511
    %513 = vrot.lane.b32.xlu0 %v198, 96
    %v514 = vpop.permute.xlu0 %513
    %515 = vrot.lane.b32.xlu0 %v203, 96
    %v516 = vpop.permute.xlu0 %515
    %517 = vrot.lane.b32.xlu0 %v208, 96
    %v518 = vpop.permute.xlu0 %517
    %519 = vrot.lane.b32.xlu0 %v213, 96
    %v520 = vpop.permute.xlu0 %519
    %521 = vrot.lane.b32.xlu0 %v218, 96
    %v522 = vpop.permute.xlu0 %521
    %523 = vrot.lane.b32.xlu0 %v223, 96
    %v524 = vpop.permute.xlu0 %523
    %525 = vrot.lane.b32.xlu0 %v228, 96
    %v526 = vpop.permute.xlu0 %525
    %527 = vrot.lane.b32.xlu0 %v233, 96
    %v528 = vpop.permute.xlu0 %527
    %529 = vrot.lane.b32.xlu0 %v238, 96
    %v530 = vpop.permute.xlu0 %529
    %531 = vrot.lane.b32.xlu0 %v243, 96
    %v532 = vpop.permute.xlu0 %531
    %533 = vrot.lane.b32.xlu0 %v248, 96
    %v534 = vpop.permute.xlu0 %533
    %551 = vst.msk [vmem:[%s8] sm:$0xff] %vm57, %v504
    %552 = vst.msk [vmem:[%s8 + $0x8] sm:$0xff] %vm57, %v506
    %553 = vst.msk [vmem:[%s8 + $0x10] sm:$0xff] %vm57, %v508
    %554 = vst.msk [vmem:[%s8 + $0x18] sm:$0xff] %vm57, %v510
    %555 = vst.msk [vmem:[%s8 + $0x20] sm:$0xff] %vm57, %v512
    %556 = vst.msk [vmem:[%s8 + $0x28] sm:$0xff] %vm57, %v514
    %557 = vst.msk [vmem:[%s8 + $0x30] sm:$0xff] %vm57, %v516
    %558 = vst.msk [vmem:[%s8 + $0x38] sm:$0xff] %vm57, %v518
    %559 = vst.msk [vmem:[%s8 + $0x40] sm:$0xff] %vm57, %v520
    %560 = vst.msk [vmem:[%s8 + $0x48] sm:$0xff] %vm57, %v522
    %561 = vst.msk [vmem:[%s8 + $0x50] sm:$0xff] %vm57, %v524
    %562 = vst.msk [vmem:[%s8 + $0x58] sm:$0xff] %vm57, %v526
    %563 = vst.msk [vmem:[%s8 + $0x60] sm:$0xff] %vm57, %v528
    %564 = vst.msk [vmem:[%s8 + $0x68] sm:$0xff] %vm57, %v530
    %565 = vst.msk [vmem:[%s8 + $0x70] sm:$0xff] %vm57, %v532
    %566 = vst.msk [vmem:[%s8 + $0x78] sm:$0xff] %vm57, %v534
    %v567 = vld [vmem:[%s6] sm:$0xff]
    %v568 = vld [vmem:[%s6 + $0x8] sm:$0xff]
    %v569 = vld [vmem:[%s6 + $0x10] sm:$0xff]
    %v570 = vld [vmem:[%s6 + $0x18] sm:$0xff]
    %v571 = vld [vmem:[%s1] sm:$0xff]
    %v572 = vld [vmem:[%s1 + $0x8] sm:$0xff]
    %v573 = vld [vmem:[%s1 + $0x10] sm:$0xff]
    %v574 = vld [vmem:[%s1 + $0x18] sm:$0xff]
    %v576 = vsel %vm57, %v567, 0
    %v579 = vsel %vm57, %v568, 0
    %v582 = vsel %vm57, %v569, 0
    %v585 = vsel %vm57, %v570, 0
    %587 = vmatprep.subr.mxu0 0.0
    %588 = vmatpush1.msra.mxu0 %v571
    %589 = vmatprep.subr.mxu0 0.0
    %590 = vmatpush1.msra.mxu0 %v572
    %591 = vmatprep.subr.mxu0 0.0
    %592 = vmatpush1.msra.mxu0 %v573
    %593 = vmatprep.subr.mxu0 0.0
    %594 = vmatpush1.msra.mxu0 %v574
    %595 = vmatprep.subr.mxu0 0.0
    %596 = vmatpush1.msra.mxu0 0.0
    %597 = vmatprep.subr.mxu0 0.0
    %598 = vmatpush1.msra.mxu0 0.0
    %599 = vmatprep.subr.mxu0 0.0
    %600 = vmatpush1.msra.mxu0 0.0
    %601 = vmatprep.subr.mxu0 0.0
    %602 = vmatpush1.msra.mxu0 0.0
    %603 = vmatprep.subr.mxu0 0.0
    %604 = vmatpush1.msra.mxu0 0.0
    %605 = vmatprep.subr.mxu0 0.0
    %606 = vmatpush1.msra.mxu0 0.0
    %607 = vmatprep.subr.mxu0 0.0
    %608 = vmatpush1.msra.mxu0 0.0
    %609 = vmatprep.subr.mxu0 0.0
    %610 = vmatpush1.msra.mxu0 0.0
    %611 = vmatprep.subr.mxu0 0.0
    %612 = vmatpush1.msra.mxu0 0.0
    %613 = vmatprep.subr.mxu0 0.0
    %614 = vmatpush1.msra.mxu0 0.0
    %615 = vmatprep.subr.mxu0 0.0
    %616 = vmatpush1.msra.mxu0 0.0
    %617 = vmatprep.subr.mxu0 0.0
    %618 = vmatpush1.msra.mxu0 0.0
    %619 = vmatprep.subr.mxu0 0.0
    %620 = vmatpush1.msra.mxu0 0.0
    %621 = vmatprep.subr.mxu0 0.0
    %622 = vmatpush1.msra.mxu0 0.0
    %623 = vmatprep.subr.mxu0 0.0
    %624 = vmatpush1.msra.mxu0 0.0
    %625 = vmatprep.subr.mxu0 0.0
    %626 = vmatpush1.msra.mxu0 0.0
    %627 = vmatprep.subr.mxu0 0.0
    %628 = vmatpush1.msra.mxu0 0.0
    %629 = vmatprep.subr.mxu0 0.0
    %630 = vmatpush1.msra.mxu0 0.0
    %631 = vmatprep.subr.mxu0 0.0
    %632 = vmatpush1.msra.mxu0 0.0
    %633 = vmatprep.subr.mxu0 0.0
    %634 = vmatpush1.msra.mxu0 0.0
    %635 = vmatprep.subr.mxu0 0.0
    %636 = vmatpush1.msra.mxu0 0.0
    %637 = vmatprep.subr.mxu0 0.0
    %638 = vmatpush1.msra.mxu0 0.0
    %639 = vmatprep.subr.mxu0 0.0
    %640 = vmatpush1.msra.mxu0 0.0
    %641 = vmatprep.subr.mxu0 0.0
    %642 = vmatpush1.msra.mxu0 0.0
    %643 = vmatprep.subr.mxu0 0.0
    %644 = vmatpush1.msra.mxu0 0.0
    %645 = vmatprep.subr.mxu0 0.0
    %646 = vmatpush1.msra.mxu0 0.0
    %647 = vmatprep.subr.mxu0 0.0
    %648 = vmatpush1.msra.mxu0 0.0
    %649 = vmatprep.subr.mxu0 0.0
    %650 = vmatpush1.msra.mxu0 0.0
    %651 = vmatprep.mubr.f32.mxu0 0.0
    %652 = vmatmul.mubr.f32.gmra.mrb[0].mxu0 %v576
    %v653 = vpop.f32.mrb[0].mxu0
    %v654 = vadd.f32 0.0, %v653
    %v655 = vpop.f32.mrb[0].mxu0
    %656 = vmatprep.mubr.f32.mxu0 0.0
    %657 = vmatmul.mubr.f32.gmra.mrb[0].mxu0 %v579
    %v658 = vpop.f32.mrb[0].mxu0
    %v659 = vadd.f32 0.0, %v658
    %v660 = vpop.f32.mrb[0].mxu0
    %661 = vmatprep.mubr.f32.mxu0 0.0
    %662 = vmatmul.mubr.f32.gmra.mrb[0].mxu0 %v582
    %v663 = vpop.f32.mrb[0].mxu0
    %v664 = vadd.f32 0.0, %v663
    %v665 = vpop.f32.mrb[0].mxu0
    %666 = vmatprep.mubr.f32.mxu0 0.0
    %667 = vmatmul.mubr.f32.gmra.mrb[0].mxu0 %v585
    %v668 = vpop.f32.mrb[0].mxu0
    %v669 = vadd.f32 0.0, %v668
    %v670 = vpop.f32.mrb[0].mxu0
    %671 = vdwg.mxu0
    %672 = vst [vmem:[#allocation2] sm:$0xff] %v654
    %673 = vst [vmem:[#allocation2 + $0x8] sm:$0xff] %v659
    %674 = vst [vmem:[#allocation2 + $0x10] sm:$0xff] %v664
    %675 = vst [vmem:[#allocation2 + $0x18] sm:$0xff] %v669
    // Predicated region
    $region30: #{tpu_custom_call.1} parent=1 // pred_check
      _
    $region31: #{tpu_custom_call.1} parent=1 // pred_check_branch
      %677 = sbr.rel (0) target = $region33
    $region32: #{tpu_custom_call.1} parent=1 // pred_region
      _
    $region33: #{tpu_custom_call.1} parent=1 // pred_fallthru
      _
    // Predicated region
    $region34: #{tpu_custom_call.1} parent=1 // pred_check
      _
    $region35: #{tpu_custom_call.1} parent=1 // pred_check_branch
      %679 = sbr.rel (0) target = $region37
    $region36: #{tpu_custom_call.1} parent=1 // pred_region
      _
    $region37: #{tpu_custom_call.1} parent=1 // pred_fallthru
      _
    // Predicated region
    $region38: #{tpu_custom_call.1} parent=1 // pred_check
      _
    $region39: #{tpu_custom_call.1} parent=1 // pred_check_branch
      %681 = sbr.rel (0) target = $region41
    $region40: #{tpu_custom_call.1} parent=1 // pred_region
      %s683 = ssub.s32 512, 512
      %684 = vsyncadd [#allocation3], %s683
      %s685 = sshll.u32 [#allocation2], 4
      %s686 = int_to_ptr.vmem [resolvable:$true] %s685
      %691 = dma.vmem_to_hbm [thread:$0]  %s686, 512, %s9, [#allocation3], 128, 128, 8
    $region41: #{tpu_custom_call.1} parent=1 // pred_fallthru
      _
    // Predicated region
    $region42: #{tpu_custom_call.1} parent=1 // pred_check
      _
    $region43: #{tpu_custom_call.1} parent=1 // pred_check_branch
      %693 = sbr.rel (0) target = $region45
    $region44: #{tpu_custom_call.1} parent=1 // pred_region
      _
    $region45: #{tpu_custom_call.1} parent=1 // pred_fallthru
      _
    // Predicated region
    $region46: #{tpu_custom_call.1} parent=1 // pred_check
      _
    $region47: #{tpu_custom_call.1} parent=1 // pred_check_branch
      %695 = sbr.rel (0) target = $region49
    $region48: #{tpu_custom_call.1} parent=1 // pred_region
      _
    $region49: #{tpu_custom_call.1} parent=1 // pred_fallthru
      _
    // Predicated region
    $region50: #{tpu_custom_call.1} parent=1 // pred_check
      _
    $region51: #{tpu_custom_call.1} parent=1 // pred_check_branch
      %697 = sbr.rel (0) target = $region53
    $region52: #{tpu_custom_call.1} parent=1 // pred_region
      %698 = dma.done [#allocation3], 512
    $region53: #{tpu_custom_call.1} parent=1 // pred_fallthru
      _
    %699 = vsyncpa [#allocation3], 1

</llo_original>
